<compile_context>
chip_gen: v7x
topology: tpu7x:2x2x1
jax: 0.10.0
libtpu: 0.0.40
codegen_flags: <defaults>
</compile_context>

<pallas_src>
import jax
import jax.numpy as jnp
from jax.experimental import pallas as pl
from jax.experimental.pallas import tpu as pltpu

HIDDEN = 64
NUM_HIDDEN_LAYERS = 5          # matches get_net default
COMPUTE_DTYPE = jnp.bfloat16   # MXU fast path; accumulation stays f32
MAX_BATCH_TILE = 4096          # rows per grid step (multiple of 128)
MIN_SPLIT_BATCH = 256          # below this, a single grid step is used


def _qnet_kernel(x_ref, w0_ref, b0_ref, wh_ref, bh_ref, wl_ref, bl_ref, out_ref):
    cd = w0_ref.dtype  # compute dtype (bf16); f32 accumulation via the MXU

    # Layer 0: one MXU pass over the (already concatenated) [s, a] features.
    h = jnp.dot(x_ref[...].astype(cd), w0_ref[...],
                preferred_element_type=jnp.float32) + b0_ref[...]
    h = jnp.maximum(h, 0.0)

    # 5 identical hidden layers; weights stacked (L,64,64), biases (L,1,64).
    for i in range(NUM_HIDDEN_LAYERS):
        h = jnp.dot(h.astype(cd), wh_ref[i],
                    preferred_element_type=jnp.float32) + bh_ref[i]
        h = jnp.maximum(h, 0.0)

    # Final 64 -> 1 layer as a VPU/XLU reduction (skips a 1-lane MXU matmul).
    q = jnp.sum(h * wl_ref[...], axis=-1, keepdims=True) + bl_ref[...]
    out_ref[...] = q.astype(out_ref.dtype)


def init_qnet_params(key, input_dim, action_dim):
    """PyTorch nn.Linear default init: U(-1/sqrt(fan_in), 1/sqrt(fan_in)).

    Weights stored as (fan_in, fan_out) (transpose of PyTorch), biases (1, fan_out).
    """
    num_in = input_dim + action_dim
    dims = [num_in] + [HIDDEN] * (NUM_HIDDEN_LAYERS + 1) + [1]
    params = []
    for i in range(len(dims) - 1):
        fan_in, fan_out = dims[i], dims[i + 1]
        key, kw, kb = jax.random.split(key, 3)
        bound = 1.0 / (fan_in ** 0.5)
        w = jax.random.uniform(kw, (fan_in, fan_out), jnp.float32, -bound, bound)
        b = jax.random.uniform(kb, (1, fan_out), jnp.float32, -bound, bound)
        params.append((w, b))
    return params


def pack_qnet_params(params):
    """Pack per-layer params into the few stacked operands the kernel expects."""
    w0, b0 = params[0]
    w0 = w0.astype(COMPUTE_DTYPE)                        # (in+act, 64), one pass
    wh = jnp.stack([params[i][0] for i in range(1, 1 + NUM_HIDDEN_LAYERS)]
                   ).astype(COMPUTE_DTYPE)               # (5, 64, 64)
    bh = jnp.stack([params[i][1] for i in range(1, 1 + NUM_HIDDEN_LAYERS)]
                   ).astype(jnp.float32)                 # (5, 1, 64)
    w_last, b_last = params[-1]
    wl = w_last.T.astype(jnp.float32)                    # (1, 64)
    bl = b_last.astype(jnp.float32)                      # (1, 1)
    return (w0, b0.astype(jnp.float32), wh, bh, wl, bl)


def _round_up(x, m):
    return ((x + m - 1) // m) * m


def _pick_batch_tile(batch):
    """Batch rows per grid step.

    Small batches: one full-array step.  Larger batches: ~B/2 rounded up to a
    multiple of 128 (capped at MAX_BATCH_TILE) so the "parallel" grid has at
    least 2 balanced steps — keeps both v7x TensorCores busy, no-op on v5e/v6e.
    """
    if batch < MIN_SPLIT_BATCH:
        return batch
    return min(MAX_BATCH_TILE, _round_up(pl.cdiv(batch, 2), 128))


@jax.jit
def qnet_forward(states, actions, packed):
    w0, b0, wh, bh, wl, bl = packed
    # torch.cat([states, actions], dim=1): tiny wrapper-side concat so layer 0
    # is a single MXU pass inside the kernel (7 -> 6 matmul passes total).
    x = jnp.concatenate([states, actions], axis=1).astype(jnp.float32)
    B, num_features = x.shape

    tb = _pick_batch_tile(B)
    grid = (pl.cdiv(B, tb),)

    flops = 2 * B * (num_features * HIDDEN
                     + NUM_HIDDEN_LAYERS * HIDDEN * HIDDEN + HIDDEN)
    param_bytes = sum(int(p.size) * p.dtype.itemsize
                      for p in (w0, b0, wh, bh, wl, bl))
    bytes_accessed = B * (num_features + 1) * 4 + param_bytes

    def _resident(arr):
        # Full-array block with a constant index map: DMA'd once, stays
        # VMEM-resident across grid steps (no re-DMA).
        n = arr.ndim
        return pl.BlockSpec(arr.shape, lambda i, n=n: (0,) * n)

    in_specs = [
        pl.BlockSpec((tb, num_features), lambda i: (i, 0)),   # [s,a] batch tile
        _resident(w0), _resident(b0),
        _resident(wh), _resident(bh),
        _resident(wl), _resident(bl),
    ]
    out_specs = pl.BlockSpec((tb, 1), lambda i: (i, 0))

    return pl.pallas_call(
        _qnet_kernel,
        out_shape=jax.ShapeDtypeStruct((B, 1), jnp.float32),
        grid=grid,
        in_specs=in_specs,
        out_specs=out_specs,
        compiler_params=pltpu.CompilerParams(
            dimension_semantics=("parallel",)),
        cost_estimate=pl.CostEstimate(
            flops=flops, transcendentals=0, bytes_accessed=bytes_accessed),
    )(x, w0, b0, wh, bh, wl, bl)


def qnet_reference(states, actions, packed):
    """Pure-JAX reference doing the identical (bf16-weight, f32-accum) math."""
    w0, b0, wh, bh, wl, bl = packed
    cd = w0.dtype
    x = jnp.concatenate([states, actions], axis=1)
    h = jnp.dot(x.astype(cd), w0, preferred_element_type=jnp.float32) + b0
    h = jnp.maximum(h, 0.0)
    for i in range(NUM_HIDDEN_LAYERS):
        h = jnp.dot(h.astype(cd), wh[i],
                    preferred_element_type=jnp.float32) + bh[i]
        h = jnp.maximum(h, 0.0)
    return jnp.sum(h * wl, axis=-1, keepdims=True) + bl


if __name__ == "__main__":
    key = jax.random.PRNGKey(0)
    k_params, k_states, k_actions = jax.random.split(key, 3)

    input_dim = 11   # small continuous-control observation
    action_dim = 3

    params = init_qnet_params(k_params, input_dim, action_dim)
    packed = pack_qnet_params(params)

    # Small demo batch (single step, block == full array path).
    batch = 2
    states = jax.random.normal(k_states, (batch, input_dim), jnp.float32)
    actions = jax.random.normal(k_actions, (batch, action_dim), jnp.float32)

    out = jax.block_until_ready(qnet_forward(states, actions, packed))
    ref = qnet_reference(states, actions, packed)
    assert out.shape == (batch, 1)
    assert jnp.allclose(out, ref, atol=1e-3, rtol=1e-3), (out, ref)

    # Batch just over the split threshold: 2 grid steps, ragged 1-row last tile.
    batch_s = 257
    k_s1, k_a1 = jax.random.split(k_actions)
    states_s = jax.random.normal(k_s1, (batch_s, input_dim), jnp.float32)
    actions_s = jax.random.normal(k_a1, (batch_s, action_dim), jnp.float32)
    out_s = jax.block_until_ready(qnet_forward(states_s, actions_s, packed))
    ref_s = qnet_reference(states_s, actions_s, packed)
    assert out_s.shape == (batch_s, 1)
    assert jnp.allclose(out_s, ref_s, atol=1e-3, rtol=1e-3)

    # Larger, non-tile-aligned batch: batch-parallel grid + partial last tile.
    batch2 = 1000
    k_s2, k_a2 = jax.random.split(k_states)
    states2 = jax.random.normal(k_s2, (batch2, input_dim), jnp.float32)
    actions2 = jax.random.normal(k_a2, (batch2, action_dim), jnp.float32)

    out2 = jax.block_until_ready(qnet_forward(states2, actions2, packed))
    ref2 = qnet_reference(states2, actions2, packed)
    assert out2.shape == (batch2, 1)
    assert jnp.allclose(out2, ref2, atol=1e-3, rtol=1e-3)

    print("KERNEL_OK")
</pallas_src>

<mosaic_0001>
module attributes {stable_mosaic.version = 11 : i64} {
  func.func @_qnet_kernel(%arg0: i32, %arg1: memref<2x14xf32, #tpu.memory_space<vmem>>, %arg2: memref<14x64xbf16, #tpu.memory_space<vmem>>, %arg3: memref<1x64xf32, #tpu.memory_space<vmem>>, %arg4: memref<5x64x64xbf16, #tpu.memory_space<vmem>>, %arg5: memref<5x1x64xf32, #tpu.memory_space<vmem>>, %arg6: memref<1x64xf32, #tpu.memory_space<vmem>>, %arg7: memref<1x1xf32, #tpu.memory_space<vmem>>, %arg8: memref<2x1xf32, #tpu.memory_space<vmem>>) attributes {dimension_semantics = [#tpu.dimension_semantics<parallel>], iteration_bounds = array<i64: 1>, scalar_prefetch = 0 : i64, scratch_operands = 0 : i64, tpu.core_type = #tpu.core_type<tc>, window_params = [{transform_indices = @transform_0, window_bounds = array<i64: 2, 14>}, {pipeline_mode = #tpu.pipeline_mode<synchronous>, transform_indices = @transform_1, window_bounds = array<i64: 14, 64>}, {pipeline_mode = #tpu.pipeline_mode<synchronous>, transform_indices = @transform_2, window_bounds = array<i64: 1, 64>}, {pipeline_mode = #tpu.pipeline_mode<synchronous>, transform_indices = @transform_3, window_bounds = array<i64: 5, 64, 64>}, {pipeline_mode = #tpu.pipeline_mode<synchronous>, transform_indices = @transform_4, window_bounds = array<i64: 5, 1, 64>}, {pipeline_mode = #tpu.pipeline_mode<synchronous>, transform_indices = @transform_5, window_bounds = array<i64: 1, 64>}, {pipeline_mode = #tpu.pipeline_mode<synchronous>, transform_indices = @transform_6, window_bounds = array<i64: 1, 1>}, {transform_indices = @transform_7, window_bounds = array<i64: 2, 1>}]} {
    %c0 = arith.constant 0 : index
    %c0_0 = arith.constant 0 : index
    %0 = vector.load %arg1[%c0, %c0_0] : memref<2x14xf32, #tpu.memory_space<vmem>>, vector<2x14xf32>
    %1 = arith.truncf %0 : vector<2x14xf32> to vector<2x14xbf16>
    %c0_1 = arith.constant 0 : index
    %c0_2 = arith.constant 0 : index
    %2 = vector.load %arg2[%c0_1, %c0_2] : memref<14x64xbf16, #tpu.memory_space<vmem>>, vector<14x64xbf16>
    %cst = arith.constant dense<0.000000e+00> : vector<2x64xf32>
    %3 = tpu.matmul %1, %2, %cst {dimension_numbers = #tpu.dot_dimension_numbers<[1], [0], [0], [1], [0, 0, 1, 1], [], []>} : vector<2x14xbf16>, vector<14x64xbf16>, vector<2x64xf32> -> vector<2x64xf32>
    %c0_3 = arith.constant 0 : index
    %c0_4 = arith.constant 0 : index
    %4 = vector.load %arg3[%c0_3, %c0_4] : memref<1x64xf32, #tpu.memory_space<vmem>>, vector<1x64xf32>
    %5 = vector.broadcast %4 : vector<1x64xf32> to vector<2x64xf32>
    %6 = arith.addf %3, %5 : vector<2x64xf32>
    %cst_5 = arith.constant 0.000000e+00 : f32
    %7 = vector.broadcast %cst_5 : f32 to vector<2x64xf32>
    %8 = arith.maximumf %6, %7 : vector<2x64xf32>
    %9 = arith.truncf %8 : vector<2x64xf32> to vector<2x64xbf16>
    %c0_6 = arith.constant 0 : index
    %c0_7 = arith.constant 0 : index
    %c0_8 = arith.constant 0 : index
    %10 = vector.load %arg4[%c0_6, %c0_7, %c0_8] : memref<5x64x64xbf16, #tpu.memory_space<vmem>>, vector<1x64x64xbf16>
    %11 = vector.shape_cast %10 : vector<1x64x64xbf16> to vector<64x64xbf16>
    %cst_9 = arith.constant dense<0.000000e+00> : vector<2x64xf32>
    %12 = tpu.matmul %9, %11, %cst_9 {dimension_numbers = #tpu.dot_dimension_numbers<[1], [0], [0], [1], [0, 0, 1, 1], [], []>} : vector<2x64xbf16>, vector<64x64xbf16>, vector<2x64xf32> -> vector<2x64xf32>
    %c0_10 = arith.constant 0 : index
    %c0_11 = arith.constant 0 : index
    %c0_12 = arith.constant 0 : index
    %13 = vector.load %arg5[%c0_10, %c0_11, %c0_12] : memref<5x1x64xf32, #tpu.memory_space<vmem>>, vector<1x1x64xf32>
    %14 = vector.shape_cast %13 : vector<1x1x64xf32> to vector<1x64xf32>
    %15 = vector.broadcast %14 : vector<1x64xf32> to vector<2x64xf32>
    %16 = arith.addf %12, %15 : vector<2x64xf32>
    %cst_13 = arith.constant 0.000000e+00 : f32
    %17 = vector.broadcast %cst_13 : f32 to vector<2x64xf32>
    %18 = arith.maximumf %16, %17 : vector<2x64xf32>
    %19 = arith.truncf %18 : vector<2x64xf32> to vector<2x64xbf16>
    %c1 = arith.constant 1 : index
    %c0_14 = arith.constant 0 : index
    %c0_15 = arith.constant 0 : index
    %20 = vector.load %arg4[%c1, %c0_14, %c0_15] : memref<5x64x64xbf16, #tpu.memory_space<vmem>>, vector<1x64x64xbf16>
    %21 = vector.shape_cast %20 : vector<1x64x64xbf16> to vector<64x64xbf16>
    %cst_16 = arith.constant dense<0.000000e+00> : vector<2x64xf32>
    %22 = tpu.matmul %19, %21, %cst_16 {dimension_numbers = #tpu.dot_dimension_numbers<[1], [0], [0], [1], [0, 0, 1, 1], [], []>} : vector<2x64xbf16>, vector<64x64xbf16>, vector<2x64xf32> -> vector<2x64xf32>
    %c1_17 = arith.constant 1 : index
    %c0_18 = arith.constant 0 : index
    %c0_19 = arith.constant 0 : index
    %23 = vector.load %arg5[%c1_17, %c0_18, %c0_19] : memref<5x1x64xf32, #tpu.memory_space<vmem>>, vector<1x1x64xf32>
    %24 = vector.shape_cast %23 : vector<1x1x64xf32> to vector<1x64xf32>
    %25 = vector.broadcast %24 : vector<1x64xf32> to vector<2x64xf32>
    %26 = arith.addf %22, %25 : vector<2x64xf32>
    %cst_20 = arith.constant 0.000000e+00 : f32
    %27 = vector.broadcast %cst_20 : f32 to vector<2x64xf32>
    %28 = arith.maximumf %26, %27 : vector<2x64xf32>
    %29 = arith.truncf %28 : vector<2x64xf32> to vector<2x64xbf16>
    %c2 = arith.constant 2 : index
    %c0_21 = arith.constant 0 : index
    %c0_22 = arith.constant 0 : index
    %30 = vector.load %arg4[%c2, %c0_21, %c0_22] : memref<5x64x64xbf16, #tpu.memory_space<vmem>>, vector<1x64x64xbf16>
    %31 = vector.shape_cast %30 : vector<1x64x64xbf16> to vector<64x64xbf16>
    %cst_23 = arith.constant dense<0.000000e+00> : vector<2x64xf32>
    %32 = tpu.matmul %29, %31, %cst_23 {dimension_numbers = #tpu.dot_dimension_numbers<[1], [0], [0], [1], [0, 0, 1, 1], [], []>} : vector<2x64xbf16>, vector<64x64xbf16>, vector<2x64xf32> -> vector<2x64xf32>
    %c2_24 = arith.constant 2 : index
    %c0_25 = arith.constant 0 : index
    %c0_26 = arith.constant 0 : index
    %33 = vector.load %arg5[%c2_24, %c0_25, %c0_26] : memref<5x1x64xf32, #tpu.memory_space<vmem>>, vector<1x1x64xf32>
    %34 = vector.shape_cast %33 : vector<1x1x64xf32> to vector<1x64xf32>
    %35 = vector.broadcast %34 : vector<1x64xf32> to vector<2x64xf32>
    %36 = arith.addf %32, %35 : vector<2x64xf32>
    %cst_27 = arith.constant 0.000000e+00 : f32
    %37 = vector.broadcast %cst_27 : f32 to vector<2x64xf32>
    %38 = arith.maximumf %36, %37 : vector<2x64xf32>
    %39 = arith.truncf %38 : vector<2x64xf32> to vector<2x64xbf16>
    %c3 = arith.constant 3 : index
    %c0_28 = arith.constant 0 : index
    %c0_29 = arith.constant 0 : index
    %40 = vector.load %arg4[%c3, %c0_28, %c0_29] : memref<5x64x64xbf16, #tpu.memory_space<vmem>>, vector<1x64x64xbf16>
    %41 = vector.shape_cast %40 : vector<1x64x64xbf16> to vector<64x64xbf16>
    %cst_30 = arith.constant dense<0.000000e+00> : vector<2x64xf32>
    %42 = tpu.matmul %39, %41, %cst_30 {dimension_numbers = #tpu.dot_dimension_numbers<[1], [0], [0], [1], [0, 0, 1, 1], [], []>} : vector<2x64xbf16>, vector<64x64xbf16>, vector<2x64xf32> -> vector<2x64xf32>
    %c3_31 = arith.constant 3 : index
    %c0_32 = arith.constant 0 : index
    %c0_33 = arith.constant 0 : index
    %43 = vector.load %arg5[%c3_31, %c0_32, %c0_33] : memref<5x1x64xf32, #tpu.memory_space<vmem>>, vector<1x1x64xf32>
    %44 = vector.shape_cast %43 : vector<1x1x64xf32> to vector<1x64xf32>
    %45 = vector.broadcast %44 : vector<1x64xf32> to vector<2x64xf32>
    %46 = arith.addf %42, %45 : vector<2x64xf32>
    %cst_34 = arith.constant 0.000000e+00 : f32
    %47 = vector.broadcast %cst_34 : f32 to vector<2x64xf32>
    %48 = arith.maximumf %46, %47 : vector<2x64xf32>
    %49 = arith.truncf %48 : vector<2x64xf32> to vector<2x64xbf16>
    %c4 = arith.constant 4 : index
    %c0_35 = arith.constant 0 : index
    %c0_36 = arith.constant 0 : index
    %50 = vector.load %arg4[%c4, %c0_35, %c0_36] : memref<5x64x64xbf16, #tpu.memory_space<vmem>>, vector<1x64x64xbf16>
    %51 = vector.shape_cast %50 : vector<1x64x64xbf16> to vector<64x64xbf16>
    %cst_37 = arith.constant dense<0.000000e+00> : vector<2x64xf32>
    %52 = tpu.matmul %49, %51, %cst_37 {dimension_numbers = #tpu.dot_dimension_numbers<[1], [0], [0], [1], [0, 0, 1, 1], [], []>} : vector<2x64xbf16>, vector<64x64xbf16>, vector<2x64xf32> -> vector<2x64xf32>
    %c4_38 = arith.constant 4 : index
    %c0_39 = arith.constant 0 : index
    %c0_40 = arith.constant 0 : index
    %53 = vector.load %arg5[%c4_38, %c0_39, %c0_40] : memref<5x1x64xf32, #tpu.memory_space<vmem>>, vector<1x1x64xf32>
    %54 = vector.shape_cast %53 : vector<1x1x64xf32> to vector<1x64xf32>
    %55 = vector.broadcast %54 : vector<1x64xf32> to vector<2x64xf32>
    %56 = arith.addf %52, %55 : vector<2x64xf32>
    %cst_41 = arith.constant 0.000000e+00 : f32
    %57 = vector.broadcast %cst_41 : f32 to vector<2x64xf32>
    %58 = arith.maximumf %56, %57 : vector<2x64xf32>
    %c0_42 = arith.constant 0 : index
    %c0_43 = arith.constant 0 : index
    %59 = vector.load %arg6[%c0_42, %c0_43] : memref<1x64xf32, #tpu.memory_space<vmem>>, vector<1x64xf32>
    %60 = vector.broadcast %59 : vector<1x64xf32> to vector<2x64xf32>
    %61 = arith.mulf %58, %60 : vector<2x64xf32>
    %cst_44 = arith.constant dense<0.000000e+00> : vector<2xf32>
    %62 = vector.multi_reduction <add>, %61, %cst_44 [1] : vector<2x64xf32> to vector<2xf32>
    %63 = vector.shape_cast %62 : vector<2xf32> to vector<2x1xf32>
    %c0_45 = arith.constant 0 : index
    %c0_46 = arith.constant 0 : index
    %64 = vector.load %arg7[%c0_45, %c0_46] : memref<1x1xf32, #tpu.memory_space<vmem>>, vector<1x1xf32>
    %65 = vector.broadcast %64 : vector<1x1xf32> to vector<2x1xf32>
    %66 = arith.addf %63, %65 : vector<2x1xf32>
    %c0_47 = arith.constant 0 : index
    %c0_48 = arith.constant 0 : index
    %67 = vector.load %arg8[%c0_47, %c0_48] : memref<2x1xf32, #tpu.memory_space<vmem>>, vector<2x1xf32>
    tpu.vector_store %arg8[%c0_47, %c0_48], %66 {strides = array<i32>} : memref<2x1xf32, #tpu.memory_space<vmem>>, vector<2x1xf32>,
    return
  }
  func.func @transform_0(%arg0: i32) -> (i32, i32) {
    %c0_i32 = arith.constant 0 : i32
    %c0_i32_0 = arith.constant 0 : i32
    return %arg0, %c0_i32 : i32, i32
  }
  func.func @transform_1(%arg0: i32) -> (i32, i32) {
    %c0_i32 = arith.constant 0 : i32
    %c0_i32_0 = arith.constant 0 : i32
    %c0_i32_1 = arith.constant 0 : i32
    return %c0_i32, %c0_i32_0 : i32, i32
  }
  func.func @transform_2(%arg0: i32) -> (i32, i32) {
    %c0_i32 = arith.constant 0 : i32
    %c0_i32_0 = arith.constant 0 : i32
    %c0_i32_1 = arith.constant 0 : i32
    return %c0_i32, %c0_i32_0 : i32, i32
  }
  func.func @transform_3(%arg0: i32) -> (i32, i32, i32) {
    %c0_i32 = arith.constant 0 : i32
    %c0_i32_0 = arith.constant 0 : i32
    %c0_i32_1 = arith.constant 0 : i32
    %c0_i32_2 = arith.constant 0 : i32
    return %c0_i32, %c0_i32_0, %c0_i32_1 : i32, i32, i32
  }
  func.func @transform_4(%arg0: i32) -> (i32, i32, i32) {
    %c0_i32 = arith.constant 0 : i32
    %c0_i32_0 = arith.constant 0 : i32
    %c0_i32_1 = arith.constant 0 : i32
    %c0_i32_2 = arith.constant 0 : i32
    return %c0_i32, %c0_i32_0, %c0_i32_1 : i32, i32, i32
  }
  func.func @transform_5(%arg0: i32) -> (i32, i32) {
    %c0_i32 = arith.constant 0 : i32
    %c0_i32_0 = arith.constant 0 : i32
    %c0_i32_1 = arith.constant 0 : i32
    return %c0_i32, %c0_i32_0 : i32, i32
  }
  func.func @transform_6(%arg0: i32) -> (i32, i32) {
    %c0_i32 = arith.constant 0 : i32
    %c0_i32_0 = arith.constant 0 : i32
    %c0_i32_1 = arith.constant 0 : i32
    return %c0_i32, %c0_i32_0 : i32, i32
  }
  func.func @transform_7(%arg0: i32) -> (i32, i32) {
    %c0_i32 = arith.constant 0 : i32
    %c0_i32_0 = arith.constant 0 : i32
    return %arg0, %c0_i32 : i32, i32
  }
}

</mosaic_0001>

<llo_original>
// kernel: qnet_forward.1
$region0: #{qnet_forward.1}
  #allocation0 [shape = 'u32[]', space=smem, size = 0x4, offset = 0x4, fixed_abs, tag = 'smem constant byte address 0x4 - core index']
  #allocation1 [shape = 'u32[144,128]{1,0:T(1,128)}', space=vmem, size = 0x12000, scoped, tag = 'internal scratch']
  #allocation2 [shape = 'f32[1,1]{1,0:T(1,128)S(1)}', space=vmem, size = 0x200, scoped, tag = 'scoped memory for qnet_forward.1']
  %s0 = inlined_call_operand.vmem [shape: f32[2,14], index: 0, kind: input, shape index: {}]
  %s1 = inlined_call_operand.vmem [shape: bf16[14,64], index: 1, kind: input, shape index: {}]
  %s2 = inlined_call_operand.vmem [shape: f32[1,64], index: 2, kind: input, shape index: {}]
  %s3 = inlined_call_operand.hbm [shape: bf16[5,64,64], index: 3, kind: input, shape index: {}]
  %s4 = inlined_call_operand.vmem [shape: f32[5,1,64], index: 4, kind: input, shape index: {}]
  %s5 = inlined_call_operand.vmem [shape: f32[1,64], index: 5, kind: input, shape index: {}]
  %s6 = inlined_call_operand.<no memory space> [shape: f32[1,1], index: 6, kind: input, shape index: {}]
  %s7 = inlined_call_operand.vmem [shape: f32[2,1], index: 7, kind: output, shape index: {}]
  %s8 = sld [smem:[#allocation0]]
  $region42: #{qnet_forward.1} parent=0
    _
  %s10 = ssub.s32 1, %s8
  %s11 = scalar_select 0, %s10, %s8
  %v12 = vstv %s6
  %13 = vst [vmem:[#allocation2] sm:$0x1] %v12
  $region1: #{qnet_forward.1} parent=0
    #allocation3 [shape = 'u8[81920]{0}', space=vmem, size = 0x14000, scoped, tag = 'input window, operand 3, single buffered']
    #allocation4 [shape = 's32[1]{0}', space=sflag, size = 0x4, scoped, tag = 'scoped memory for qnet_forward.1']
    %14 = vsyncpa [#allocation4], 0
    // Predicated region
    $region2: #{qnet_forward.1} parent=1 // pred_check
      _
    $region3: #{qnet_forward.1} parent=1 // pred_check_branch
      %16 = sbr.rel (0) target = $region5
    $region4: #{qnet_forward.1} parent=1 // pred_region
      _
    $region5: #{qnet_forward.1} parent=1 // pred_fallthru
      _
    // Predicated region
    $region6: #{qnet_forward.1} parent=1 // pred_check
      _
    $region7: #{qnet_forward.1} parent=1 // pred_check_branch
      %18 = sbr.rel (0) target = $region9
    $region8: #{qnet_forward.1} parent=1 // pred_region
      _
    $region9: #{qnet_forward.1} parent=1 // pred_fallthru
      _
    // Predicated region
    $region10: #{qnet_forward.1} parent=1 // pred_check
      _
    $region11: #{qnet_forward.1} parent=1 // pred_check_branch
      %20 = sbr.rel (0) target = $region13
    $region12: #{qnet_forward.1} parent=1 // pred_region
      _
    $region13: #{qnet_forward.1} parent=1 // pred_fallthru
      _
    // Predicated region
    $region14: #{qnet_forward.1} parent=1 // pred_check
      _
    $region15: #{qnet_forward.1} parent=1 // pred_check_branch
      %22 = sbr.rel (0) target = $region17
    $region16: #{qnet_forward.1} parent=1 // pred_region
      %s24 = ssub.s32 2560, 2560
      %25 = vsyncadd [#allocation4], %s24
      %s26 = sshll.u32 [#allocation3], 4
      %s27 = int_to_ptr.vmem [resolvable:$true] %s26
      %32 = dma.hbm_to_vmem [thread:$0]  %s3, 2560, %s27, [#allocation4], 64, 64, 4
    $region17: #{qnet_forward.1} parent=1 // pred_fallthru
      _
    // Predicated region
    $region18: #{qnet_forward.1} parent=1 // pred_check
      _
    $region19: #{qnet_forward.1} parent=1 // pred_check_branch
      %34 = sbr.rel (0) target = $region21
    $region20: #{qnet_forward.1} parent=1 // pred_region
      _
    $region21: #{qnet_forward.1} parent=1 // pred_fallthru
      _
    // Predicated region
    $region22: #{qnet_forward.1} parent=1 // pred_check
      _
    $region23: #{qnet_forward.1} parent=1 // pred_check_branch
      %36 = sbr.rel (0) target = $region25
    $region24: #{qnet_forward.1} parent=1 // pred_region
      _
    $region25: #{qnet_forward.1} parent=1 // pred_fallthru
      _
    // Predicated region
    $region26: #{qnet_forward.1} parent=1 // pred_check
      _
    $region27: #{qnet_forward.1} parent=1 // pred_check_branch
      %38 = sbr.rel (0) target = $region29
    $region28: #{qnet_forward.1} parent=1 // pred_region
      _
    $region29: #{qnet_forward.1} parent=1 // pred_fallthru
      _
    // Predicated region
    $region30: #{qnet_forward.1} parent=1 // pred_check
      _
    $region31: #{qnet_forward.1} parent=1 // pred_check_branch
      %40 = sbr.rel (0) target = $region33
    $region32: #{qnet_forward.1} parent=1 // pred_region
      %41 = dma.done [#allocation4], 2560
    $region33: #{qnet_forward.1} parent=1 // pred_fallthru
      _
    %v43 = vld [vmem:[%s0] sm:$0x3]
    %v44 = vpack.c.bf16 %v43, %v43
    %v45 = vld [vmem:[%s1] sm:$0xf]
    %v46 = vld [vmem:[%s1 + $0x4] sm:$0x7]
    %v47 = vld [vmem:[%s2] sm:$0x1]
    %v49 = vlaneseq
    %v50 = vshrl.u32 %v49, 7
    %v51 = vsub.s32 0, %v50
    %v52 = vrot.slane %v47, %v51
    %v56 = vunpack.c.l.b16 %v45
    %v57 = vunpack.c.l.b16 %v46
    %v58 = vpack.c.b16 %v57, %v56
    %vm59 = vcmask 113664
    %v61 = vsel %vm59, %v44, 0
    %vm63 = vcmask 1046528
    %v65 = vsel %vm63, %v58, 0
    %67 = vmatprep.subr.bf16.mxu0 0
    %68 = vmatpush1.bf16.msra.mxu0 %v65
    %69 = vmatprep.subr.bf16.mxu0 0
    %70 = vmatpush1.bf16.msra.mxu0 0
    %71 = vmatprep.subr.bf16.mxu0 0
    %72 = vmatpush1.bf16.msra.mxu0 0
    %73 = vmatprep.subr.bf16.mxu0 0
    %74 = vmatpush1.bf16.msra.mxu0 0
    %75 = vmatprep.subr.bf16.mxu0 0
    %76 = vmatpush1.bf16.msra.mxu0 0
    %77 = vmatprep.subr.bf16.mxu0 0
    %78 = vmatpush1.bf16.msra.mxu0 0
    %79 = vmatprep.subr.bf16.mxu0 0
    %80 = vmatpush1.bf16.msra.mxu0 0
    %81 = vmatprep.subr.bf16.mxu0 0
    %82 = vmatpush1.bf16.msra.mxu0 0
    %83 = vmatprep.subr.bf16.mxu0 0
    %84 = vmatpush1.bf16.msra.mxu0 0
    %85 = vmatprep.subr.bf16.mxu0 0
    %86 = vmatpush1.bf16.msra.mxu0 0
    %87 = vmatprep.subr.bf16.mxu0 0
    %88 = vmatpush1.bf16.msra.mxu0 0
    %89 = vmatprep.subr.bf16.mxu0 0
    %90 = vmatpush1.bf16.msra.mxu0 0
    %91 = vmatprep.subr.bf16.mxu0 0
    %92 = vmatpush1.bf16.msra.mxu0 0
    %93 = vmatprep.subr.bf16.mxu0 0
    %94 = vmatpush1.bf16.msra.mxu0 0
    %95 = vmatprep.subr.bf16.mxu0 0
    %96 = vmatpush1.bf16.msra.mxu0 0
    %97 = vmatprep.subr.bf16.mxu0 0
    %98 = vmatpush1.bf16.msra.mxu0 0
    %99 = vmatprep.mubr.bf16.mxu0 0
    %100 = vmatmul.mubr.bf16.gmra.mrb[0].mxu0 %v61
    %v101 = vpop.f32.mrb[0].mxu0
    %v102 = vadd.f32 %v52, %v101
    %v103 = vpop.f32.mrb[0].mxu0
    %v104 = vpop.f32.mrb[0].mxu0
    %v105 = vpop.f32.mrb[0].mxu0
    %106 = vdwg.mxu0
    %v107 = vmax.f32 %v102, 0.0
    %v108 = vpack.c.bf16 %v107, %v107
    %v109 = vld [vmem:[#allocation3] sm:$0xf]
    %v110 = vld [vmem:[#allocation3 + $0x4] sm:$0xf]
    %v111 = vld [vmem:[#allocation3 + $0x8] sm:$0xf]
    %v112 = vld [vmem:[#allocation3 + $0xc] sm:$0xf]
    %v113 = vld [vmem:[#allocation3 + $0x10] sm:$0xf]
    %v114 = vld [vmem:[#allocation3 + $0x14] sm:$0xf]
    %v115 = vld [vmem:[#allocation3 + $0x18] sm:$0xf]
    %v116 = vld [vmem:[#allocation3 + $0x1c] sm:$0xf]
    %v117 = vld [vmem:[%s4] sm:$0x1]
    %v119 = vlaneseq
    %v120 = vshrl.u32 %v119, 7
    %v121 = vsub.s32 0, %v120
    %v122 = vrot.slane %v117, %v121
    %v132 = vunpack.c.l.b16 %v109
    %v133 = vunpack.c.l.b16 %v110
    %v134 = vunpack.c.l.b16 %v111
    %v135 = vunpack.c.l.b16 %v112
    %v136 = vunpack.c.l.b16 %v113
    %v137 = vunpack.c.l.b16 %v114
    %v138 = vunpack.c.l.b16 %v115
    %v139 = vunpack.c.l.b16 %v116
    %v140 = vpack.c.b16 %v133, %v132
    %v141 = vpack.c.b16 %v135, %v134
    %v142 = vpack.c.b16 %v137, %v136
    %v143 = vpack.c.b16 %v139, %v138
    %vm148 = vcmask 523264
    %v150 = vsel %vm148, %v108, 0
    %152 = vmatprep.subr.bf16.mxu0 0
    %153 = vmatpush1.bf16.msra.mxu0 %v140
    %154 = vmatprep.subr.bf16.mxu0 0
    %155 = vmatpush1.bf16.msra.mxu0 %v141
    %156 = vmatprep.subr.bf16.mxu0 0
    %157 = vmatpush1.bf16.msra.mxu0 %v142
    %158 = vmatprep.subr.bf16.mxu0 0
    %159 = vmatpush1.bf16.msra.mxu0 %v143
    %160 = vmatprep.subr.bf16.mxu0 0
    %161 = vmatpush1.bf16.msra.mxu0 0
    %162 = vmatprep.subr.bf16.mxu0 0
    %163 = vmatpush1.bf16.msra.mxu0 0
    %164 = vmatprep.subr.bf16.mxu0 0
    %165 = vmatpush1.bf16.msra.mxu0 0
    %166 = vmatprep.subr.bf16.mxu0 0
    %167 = vmatpush1.bf16.msra.mxu0 0
    %168 = vmatprep.subr.bf16.mxu0 0
    %169 = vmatpush1.bf16.msra.mxu0 0
    %170 = vmatprep.subr.bf16.mxu0 0
    %171 = vmatpush1.bf16.msra.mxu0 0
    %172 = vmatprep.subr.bf16.mxu0 0
    %173 = vmatpush1.bf16.msra.mxu0 0
    %174 = vmatprep.subr.bf16.mxu0 0
    %175 = vmatpush1.bf16.msra.mxu0 0
    %176 = vmatprep.subr.bf16.mxu0 0
    %177 = vmatpush1.bf16.msra.mxu0 0
    %178 = vmatprep.subr.bf16.mxu0 0
    %179 = vmatpush1.bf16.msra.mxu0 0
    %180 = vmatprep.subr.bf16.mxu0 0
    %181 = vmatpush1.bf16.msra.mxu0 0
    %182 = vmatprep.subr.bf16.mxu0 0
    %183 = vmatpush1.bf16.msra.mxu0 0
    %184 = vmatprep.mubr.bf16.mxu0 0
    %185 = vmatmul.mubr.bf16.gmra.mrb[0].mxu0 %v150
    %v186 = vpop.f32.mrb[0].mxu0
    %v187 = vadd.f32 %v122, %v186
    %v188 = vpop.f32.mrb[0].mxu0
    %v189 = vpop.f32.mrb[0].mxu0
    %v190 = vpop.f32.mrb[0].mxu0
    %191 = vdwg.mxu0
    %v192 = vmax.f32 %v187, 0.0
    %v193 = vpack.c.bf16 %v192, %v192
    %s194 = scalar_lea.vmem [#allocation3], 32
    %v195 = vld [vmem:[%s194] sm:$0xf]
    %v196 = vld [vmem:[%s194 + $0x4] sm:$0xf]
    %v197 = vld [vmem:[%s194 + $0x8] sm:$0xf]
    %v198 = vld [vmem:[%s194 + $0xc] sm:$0xf]
    %v199 = vld [vmem:[%s194 + $0x10] sm:$0xf]
    %v200 = vld [vmem:[%s194 + $0x14] sm:$0xf]
    %v201 = vld [vmem:[%s194 + $0x18] sm:$0xf]
    %v202 = vld [vmem:[%s194 + $0x1c] sm:$0xf]
    %s203 = scalar_lea.vmem %s4, 1
    %v204 = vld [vmem:[%s203] sm:$0x1]
    %v206 = vlaneseq
    %v207 = vshrl.u32 %v206, 7
    %v208 = vsub.s32 0, %v207
    %v209 = vrot.slane %v204, %v208
    %v219 = vunpack.c.l.b16 %v195
    %v220 = vunpack.c.l.b16 %v196
    %v221 = vunpack.c.l.b16 %v197
    %v222 = vunpack.c.l.b16 %v198
    %v223 = vunpack.c.l.b16 %v199
    %v224 = vunpack.c.l.b16 %v200
    %v225 = vunpack.c.l.b16 %v201
    %v226 = vunpack.c.l.b16 %v202
    %v227 = vpack.c.b16 %v220, %v219
    %v228 = vpack.c.b16 %v222, %v221
    %v229 = vpack.c.b16 %v224, %v223
    %v230 = vpack.c.b16 %v226, %v225
    %v236 = vsel %vm148, %v193, 0
    %238 = vmatprep.subr.bf16.mxu0 0
    %239 = vmatpush1.bf16.msra.mxu0 %v227
    %240 = vmatprep.subr.bf16.mxu0 0
    %241 = vmatpush1.bf16.msra.mxu0 %v228
    %242 = vmatprep.subr.bf16.mxu0 0
    %243 = vmatpush1.bf16.msra.mxu0 %v229
    %244 = vmatprep.subr.bf16.mxu0 0
    %245 = vmatpush1.bf16.msra.mxu0 %v230
    %246 = vmatprep.subr.bf16.mxu0 0
    %247 = vmatpush1.bf16.msra.mxu0 0
    %248 = vmatprep.subr.bf16.mxu0 0
    %249 = vmatpush1.bf16.msra.mxu0 0
    %250 = vmatprep.subr.bf16.mxu0 0
    %251 = vmatpush1.bf16.msra.mxu0 0
    %252 = vmatprep.subr.bf16.mxu0 0
    %253 = vmatpush1.bf16.msra.mxu0 0
    %254 = vmatprep.subr.bf16.mxu0 0
    %255 = vmatpush1.bf16.msra.mxu0 0
    %256 = vmatprep.subr.bf16.mxu0 0
    %257 = vmatpush1.bf16.msra.mxu0 0
    %258 = vmatprep.subr.bf16.mxu0 0
    %259 = vmatpush1.bf16.msra.mxu0 0
    %260 = vmatprep.subr.bf16.mxu0 0
    %261 = vmatpush1.bf16.msra.mxu0 0
    %262 = vmatprep.subr.bf16.mxu0 0
    %263 = vmatpush1.bf16.msra.mxu0 0
    %264 = vmatprep.subr.bf16.mxu0 0
    %265 = vmatpush1.bf16.msra.mxu0 0
    %266 = vmatprep.subr.bf16.mxu0 0
    %267 = vmatpush1.bf16.msra.mxu0 0
    %268 = vmatprep.subr.bf16.mxu0 0
    %269 = vmatpush1.bf16.msra.mxu0 0
    %270 = vmatprep.mubr.bf16.mxu0 0
    %271 = vmatmul.mubr.bf16.gmra.mrb[0].mxu0 %v236
    %v272 = vpop.f32.mrb[0].mxu0
    %v273 = vadd.f32 %v209, %v272
    %v274 = vpop.f32.mrb[0].mxu0
    %v275 = vpop.f32.mrb[0].mxu0
    %v276 = vpop.f32.mrb[0].mxu0
    %277 = vdwg.mxu0
    %v278 = vmax.f32 %v273, 0.0
    %v279 = vpack.c.bf16 %v278, %v278
    %s280 = scalar_lea.vmem [#allocation3], 64
    %v281 = vld [vmem:[%s280] sm:$0xf]
    %v282 = vld [vmem:[%s280 + $0x4] sm:$0xf]
    %v283 = vld [vmem:[%s280 + $0x8] sm:$0xf]
    %v284 = vld [vmem:[%s280 + $0xc] sm:$0xf]
    %v285 = vld [vmem:[%s280 + $0x10] sm:$0xf]
    %v286 = vld [vmem:[%s280 + $0x14] sm:$0xf]
    %v287 = vld [vmem:[%s280 + $0x18] sm:$0xf]
    %v288 = vld [vmem:[%s280 + $0x1c] sm:$0xf]
    %s289 = scalar_lea.vmem %s4, 2
    %v290 = vld [vmem:[%s289] sm:$0x1]
    %v292 = vlaneseq
    %v293 = vshrl.u32 %v292, 7
    %v294 = vsub.s32 0, %v293
    %v295 = vrot.slane %v290, %v294
    %v305 = vunpack.c.l.b16 %v281
    %v306 = vunpack.c.l.b16 %v282
    %v307 = vunpack.c.l.b16 %v283
    %v308 = vunpack.c.l.b16 %v284
    %v309 = vunpack.c.l.b16 %v285
    %v310 = vunpack.c.l.b16 %v286
    %v311 = vunpack.c.l.b16 %v287
    %v312 = vunpack.c.l.b16 %v288
    %v313 = vpack.c.b16 %v306, %v305
    %v314 = vpack.c.b16 %v308, %v307
    %v315 = vpack.c.b16 %v310, %v309
    %v316 = vpack.c.b16 %v312, %v311
    %v322 = vsel %vm148, %v279, 0
    %324 = vmatprep.subr.bf16.mxu0 0
    %325 = vmatpush1.bf16.msra.mxu0 %v313
    %326 = vmatprep.subr.bf16.mxu0 0
    %327 = vmatpush1.bf16.msra.mxu0 %v314
    %328 = vmatprep.subr.bf16.mxu0 0
    %329 = vmatpush1.bf16.msra.mxu0 %v315
    %330 = vmatprep.subr.bf16.mxu0 0
    %331 = vmatpush1.bf16.msra.mxu0 %v316
    %332 = vmatprep.subr.bf16.mxu0 0
    %333 = vmatpush1.bf16.msra.mxu0 0
    %334 = vmatprep.subr.bf16.mxu0 0
    %335 = vmatpush1.bf16.msra.mxu0 0
    %336 = vmatprep.subr.bf16.mxu0 0
    %337 = vmatpush1.bf16.msra.mxu0 0
    %338 = vmatprep.subr.bf16.mxu0 0
    %339 = vmatpush1.bf16.msra.mxu0 0
    %340 = vmatprep.subr.bf16.mxu0 0
    %341 = vmatpush1.bf16.msra.mxu0 0
    %342 = vmatprep.subr.bf16.mxu0 0
    %343 = vmatpush1.bf16.msra.mxu0 0
    %344 = vmatprep.subr.bf16.mxu0 0
    %345 = vmatpush1.bf16.msra.mxu0 0
    %346 = vmatprep.subr.bf16.mxu0 0
    %347 = vmatpush1.bf16.msra.mxu0 0
    %348 = vmatprep.subr.bf16.mxu0 0
    %349 = vmatpush1.bf16.msra.mxu0 0
    %350 = vmatprep.subr.bf16.mxu0 0
    %351 = vmatpush1.bf16.msra.mxu0 0
    %352 = vmatprep.subr.bf16.mxu0 0
    %353 = vmatpush1.bf16.msra.mxu0 0
    %354 = vmatprep.subr.bf16.mxu0 0
    %355 = vmatpush1.bf16.msra.mxu0 0
    %356 = vmatprep.mubr.bf16.mxu0 0
    %357 = vmatmul.mubr.bf16.gmra.mrb[0].mxu0 %v322
    %v358 = vpop.f32.mrb[0].mxu0
    %v359 = vadd.f32 %v295, %v358
    %v360 = vpop.f32.mrb[0].mxu0
    %v361 = vpop.f32.mrb[0].mxu0
    %v362 = vpop.f32.mrb[0].mxu0
    %363 = vdwg.mxu0
    %v364 = vmax.f32 %v359, 0.0
    %v365 = vpack.c.bf16 %v364, %v364
    %s366 = scalar_lea.vmem [#allocation3], 96
    %v367 = vld [vmem:[%s366] sm:$0xf]
    %v368 = vld [vmem:[%s366 + $0x4] sm:$0xf]
    %v369 = vld [vmem:[%s366 + $0x8] sm:$0xf]
    %v370 = vld [vmem:[%s366 + $0xc] sm:$0xf]
    %v371 = vld [vmem:[%s366 + $0x10] sm:$0xf]
    %v372 = vld [vmem:[%s366 + $0x14] sm:$0xf]
    %v373 = vld [vmem:[%s366 + $0x18] sm:$0xf]
    %v374 = vld [vmem:[%s366 + $0x1c] sm:$0xf]
    %s375 = scalar_lea.vmem %s4, 3
    %v376 = vld [vmem:[%s375] sm:$0x1]
    %v378 = vlaneseq
    %v379 = vshrl.u32 %v378, 7
    %v380 = vsub.s32 0, %v379
    %v381 = vrot.slane %v376, %v380
    %v391 = vunpack.c.l.b16 %v367
    %v392 = vunpack.c.l.b16 %v368
    %v393 = vunpack.c.l.b16 %v369
    %v394 = vunpack.c.l.b16 %v370
    %v395 = vunpack.c.l.b16 %v371
    %v396 = vunpack.c.l.b16 %v372
    %v397 = vunpack.c.l.b16 %v373
    %v398 = vunpack.c.l.b16 %v374
    %v399 = vpack.c.b16 %v392, %v391
    %v400 = vpack.c.b16 %v394, %v393
    %v401 = vpack.c.b16 %v396, %v395
    %v402 = vpack.c.b16 %v398, %v397
    %v408 = vsel %vm148, %v365, 0
    %410 = vmatprep.subr.bf16.mxu0 0
    %411 = vmatpush1.bf16.msra.mxu0 %v399
    %412 = vmatprep.subr.bf16.mxu0 0
    %413 = vmatpush1.bf16.msra.mxu0 %v400
    %414 = vmatprep.subr.bf16.mxu0 0
    %415 = vmatpush1.bf16.msra.mxu0 %v401
    %416 = vmatprep.subr.bf16.mxu0 0
    %417 = vmatpush1.bf16.msra.mxu0 %v402
    %418 = vmatprep.subr.bf16.mxu0 0
    %419 = vmatpush1.bf16.msra.mxu0 0
    %420 = vmatprep.subr.bf16.mxu0 0
    %421 = vmatpush1.bf16.msra.mxu0 0
    %422 = vmatprep.subr.bf16.mxu0 0
    %423 = vmatpush1.bf16.msra.mxu0 0
    %424 = vmatprep.subr.bf16.mxu0 0
    %425 = vmatpush1.bf16.msra.mxu0 0
    %426 = vmatprep.subr.bf16.mxu0 0
    %427 = vmatpush1.bf16.msra.mxu0 0
    %428 = vmatprep.subr.bf16.mxu0 0
    %429 = vmatpush1.bf16.msra.mxu0 0
    %430 = vmatprep.subr.bf16.mxu0 0
    %431 = vmatpush1.bf16.msra.mxu0 0
    %432 = vmatprep.subr.bf16.mxu0 0
    %433 = vmatpush1.bf16.msra.mxu0 0
    %434 = vmatprep.subr.bf16.mxu0 0
    %435 = vmatpush1.bf16.msra.mxu0 0
    %436 = vmatprep.subr.bf16.mxu0 0
    %437 = vmatpush1.bf16.msra.mxu0 0
    %438 = vmatprep.subr.bf16.mxu0 0
    %439 = vmatpush1.bf16.msra.mxu0 0
    %440 = vmatprep.subr.bf16.mxu0 0
    %441 = vmatpush1.bf16.msra.mxu0 0
    %442 = vmatprep.mubr.bf16.mxu0 0
    %443 = vmatmul.mubr.bf16.gmra.mrb[0].mxu0 %v408
    %v444 = vpop.f32.mrb[0].mxu0
    %v445 = vadd.f32 %v381, %v444
    %v446 = vpop.f32.mrb[0].mxu0
    %v447 = vpop.f32.mrb[0].mxu0
    %v448 = vpop.f32.mrb[0].mxu0
    %449 = vdwg.mxu0
    %v450 = vmax.f32 %v445, 0.0
    %v451 = vpack.c.bf16 %v450, %v450
    %s452 = scalar_lea.vmem [#allocation3], 128
    %v453 = vld [vmem:[%s452] sm:$0xf]
    %v454 = vld [vmem:[%s452 + $0x4] sm:$0xf]
    %v455 = vld [vmem:[%s452 + $0x8] sm:$0xf]
    %v456 = vld [vmem:[%s452 + $0xc] sm:$0xf]
    %v457 = vld [vmem:[%s452 + $0x10] sm:$0xf]
    %v458 = vld [vmem:[%s452 + $0x14] sm:$0xf]
    %v459 = vld [vmem:[%s452 + $0x18] sm:$0xf]
    %v460 = vld [vmem:[%s452 + $0x1c] sm:$0xf]
    %s461 = scalar_lea.vmem %s4, 4
    %v462 = vld [vmem:[%s461] sm:$0x1]
    %v464 = vlaneseq
    %v465 = vshrl.u32 %v464, 7
    %v466 = vsub.s32 0, %v465
    %v467 = vrot.slane %v462, %v466
    %v477 = vunpack.c.l.b16 %v453
    %v478 = vunpack.c.l.b16 %v454
    %v479 = vunpack.c.l.b16 %v455
    %v480 = vunpack.c.l.b16 %v456
    %v481 = vunpack.c.l.b16 %v457
    %v482 = vunpack.c.l.b16 %v458
    %v483 = vunpack.c.l.b16 %v459
    %v484 = vunpack.c.l.b16 %v460
    %v485 = vpack.c.b16 %v478, %v477
    %v486 = vpack.c.b16 %v480, %v479
    %v487 = vpack.c.b16 %v482, %v481
    %v488 = vpack.c.b16 %v484, %v483
    %v494 = vsel %vm148, %v451, 0
    %496 = vmatprep.subr.bf16.mxu0 0
    %497 = vmatpush1.bf16.msra.mxu0 %v485
    %498 = vmatprep.subr.bf16.mxu0 0
    %499 = vmatpush1.bf16.msra.mxu0 %v486
    %500 = vmatprep.subr.bf16.mxu0 0
    %501 = vmatpush1.bf16.msra.mxu0 %v487
    %502 = vmatprep.subr.bf16.mxu0 0
    %503 = vmatpush1.bf16.msra.mxu0 %v488
    %504 = vmatprep.subr.bf16.mxu0 0
    %505 = vmatpush1.bf16.msra.mxu0 0
    %506 = vmatprep.subr.bf16.mxu0 0
    %507 = vmatpush1.bf16.msra.mxu0 0
    %508 = vmatprep.subr.bf16.mxu0 0
    %509 = vmatpush1.bf16.msra.mxu0 0
    %510 = vmatprep.subr.bf16.mxu0 0
    %511 = vmatpush1.bf16.msra.mxu0 0
    %512 = vmatprep.subr.bf16.mxu0 0
    %513 = vmatpush1.bf16.msra.mxu0 0
    %514 = vmatprep.subr.bf16.mxu0 0
    %515 = vmatpush1.bf16.msra.mxu0 0
    %516 = vmatprep.subr.bf16.mxu0 0
    %517 = vmatpush1.bf16.msra.mxu0 0
    %518 = vmatprep.subr.bf16.mxu0 0
    %519 = vmatpush1.bf16.msra.mxu0 0
    %520 = vmatprep.subr.bf16.mxu0 0
    %521 = vmatpush1.bf16.msra.mxu0 0
    %522 = vmatprep.subr.bf16.mxu0 0
    %523 = vmatpush1.bf16.msra.mxu0 0
    %524 = vmatprep.subr.bf16.mxu0 0
    %525 = vmatpush1.bf16.msra.mxu0 0
    %526 = vmatprep.subr.bf16.mxu0 0
    %527 = vmatpush1.bf16.msra.mxu0 0
    %528 = vmatprep.mubr.bf16.mxu0 0
    %529 = vmatmul.mubr.bf16.gmra.mrb[0].mxu0 %v494
    %v530 = vpop.f32.mrb[0].mxu0
    %v531 = vadd.f32 %v467, %v530
    %v532 = vpop.f32.mrb[0].mxu0
    %v533 = vpop.f32.mrb[0].mxu0
    %v534 = vpop.f32.mrb[0].mxu0
    %535 = vdwg.mxu0
    %v536 = vmax.f32 %v531, 0.0
    %v537 = vld [vmem:[%s5] sm:$0x1]
    %v539 = vlaneseq
    %v540 = vshrl.u32 %v539, 7
    %v541 = vsub.s32 0, %v540
    %v542 = vrot.slane %v537, %v541
    %v544 = vmul.f32 %v536, %v542
    %vm545 = vcmask 517120
    %v546 = vsel %vm545, %v544, 0.0
    %547 = vadd.xlane.f32.xlu0 %v546
    %v548 = vpop.xlane.xlu0 %547
    %v549 = vld [vmem:[#allocation2] sm:$0x1]
    %v551 = vlaneseq
    %v552 = vshrl.u32 %v551, 7
    %v553 = vsub.s32 0, %v552
    %v554 = vrot.slane %v549, %v553
    %v556 = vadd.f32 %v548, %v554
    %vm557 = vcmask 1024
    %558 = vst.msk [vmem:[%s7] sm:$0x3] %vm557, %v556
    // Predicated region
    $region34: #{qnet_forward.1} parent=1 // pred_check
      _
    $region35: #{qnet_forward.1} parent=1 // pred_check_branch
      %560 = sbr.rel (0) target = $region37
    $region36: #{qnet_forward.1} parent=1 // pred_region
      _
    $region37: #{qnet_forward.1} parent=1 // pred_fallthru
      _
    // Predicated region
    $region38: #{qnet_forward.1} parent=1 // pred_check
      _
    $region39: #{qnet_forward.1} parent=1 // pred_check_branch
      %562 = sbr.rel (0) target = $region41
    $region40: #{qnet_forward.1} parent=1 // pred_region
      _
    $region41: #{qnet_forward.1} parent=1 // pred_fallthru
      _
    %563 = vsyncpa [#allocation4], 1

</llo_original>
